<compile_context>
chip_gen: v6e
topology: v6e:2x2x1
jax: 0.10.0
libtpu: 0.0.40
codegen_flags: <defaults>
</compile_context>

<pallas_src>
import functools
import math

import jax
import jax.numpy as jnp
from jax.experimental import pallas as pl
from jax.experimental.pallas import tpu as pltpu

_CLIP_LO = 1e-7
_CLIP_HI = 1.0 - 1e-7
_LOG_LO = math.log(_CLIP_LO)          # log(clip(p)) == clip(log p) (log monotone)
_LOG_HI = math.log1p(-1e-7)


def _focal_loss_kernel(loc_p_ref, loc_t_ref, cls_p_ref, tgt_ref, out_ref, *,
                       total_rows):
    # out_ref (SMEM, shape (4,)): [loss, loc_loss_sum, cls_loss_sum, num_pos]
    i = pl.program_id(0)
    tm = tgt_ref.shape[0]

    @pl.when(i == 0)
    def _init():
        out_ref[1] = jnp.float32(0.0)
        out_ref[2] = jnp.float32(0.0)
        out_ref[3] = jnp.float32(0.0)

    tgt = tgt_ref[...].astype(jnp.int32)                      # (TM, 1)
    # Global row index of this tile's rows -> mask the ragged tail block
    # (out-of-bounds rows of the last block hold unspecified data).
    row = jax.lax.broadcasted_iota(jnp.int32, (tm, 1), 0) + i * tm
    valid = row < total_rows
    pos = jnp.logical_and(tgt > 0, valid)                     # (TM, 1) bool
    pos_neg = jnp.logical_and(tgt > -1, valid)                # (TM, 1) bool

    # ---- smooth L1 (beta = 1, sum reduction) on positive rows --------------
    d = loc_p_ref[...].astype(jnp.float32) - loc_t_ref[...].astype(jnp.float32)
    ad = jnp.abs(d)
    sl1 = jnp.where(ad < 1.0, 0.5 * d * d, ad - 0.5)          # (TM, 4)
    loc_partial = jnp.sum(jnp.where(pos, sl1, 0.0))           # where, not *: OOB-safe

    # ---- focal loss via log-softmax + target gather -------------------------
    #   logp_t = x[target] - logsumexp(x); p_t = exp(logp_t)
    #   fl     = -(1 - clip(p_t))^2 * log(clip(p_t))
    x = cls_p_ref[...].astype(jnp.float32)                    # (TM, C)
    m = jnp.max(x, axis=-1, keepdims=True)
    s = jnp.sum(jnp.exp(x - m), axis=-1, keepdims=True)
    lse = m + jnp.log(s)
    col = jax.lax.broadcasted_iota(jnp.int32, x.shape, 1)
    x_t = jnp.sum(jnp.where(col == tgt, x, 0.0), axis=-1, keepdims=True)
    logp_t = x_t - lse                                        # (TM, 1)
    p_t = jnp.exp(logp_t)
    p_c = jnp.clip(p_t, _CLIP_LO, _CLIP_HI)
    logp_c = jnp.clip(logp_t, _LOG_LO, _LOG_HI)               # == log(clip(p_t))
    fl = -(1.0 - p_c) ** 2 * logp_c                           # (TM, 1)
    cls_partial = jnp.sum(jnp.where(pos_neg, fl, 0.0))

    pos_partial = jnp.sum(jnp.where(pos, 1.0, 0.0))

    out_ref[1] += loc_partial
    out_ref[2] += cls_partial
    out_ref[3] += pos_partial

    @pl.when(i == pl.num_programs(0) - 1)
    def _finalize():
        denom = jnp.maximum(out_ref[3], jnp.float32(1.0))
        out_ref[0] = (out_ref[1] + out_ref[2]) / denom


@functools.partial(jax.jit, static_argnames=("num_classes", "tile_rows"))
def focal_loss_pallas(loc_preds, loc_targets, cls_preds, cls_targets,
                      num_classes, tile_rows=1024):
    B, N, _ = loc_preds.shape
    C = num_classes + 1
    T = B * N

    # Reshape only -- keep native storage dtypes (cast to f32 inside the kernel).
    loc_p = loc_preds.reshape(T, 4)
    loc_t = loc_targets.reshape(T, 4)
    cls_p = cls_preds.reshape(T, C)
    tgt = cls_targets.reshape(T, 1)
    if tgt.dtype != jnp.int32:
        tgt = tgt.astype(jnp.int32)

    # Sublane alignment only: pad to a multiple of 8 rows (<= 7 rows, and only
    # when T % 8 != 0).  The ragged tail w.r.t. tile_rows is masked in-kernel.
    T_round = ((T + 7) // 8) * 8
    pad = T_round - T
    if pad:
        loc_p = jnp.pad(loc_p, ((0, pad), (0, 0)))
        loc_t = jnp.pad(loc_t, ((0, pad), (0, 0)))
        cls_p = jnp.pad(cls_p, ((0, pad), (0, 0)))
        tgt = jnp.pad(tgt, ((0, pad), (0, 0)), constant_values=-1)

    tm = min(tile_rows, T_round)
    tm = max(8, (tm // 8) * 8)
    grid = ((T_round + tm - 1) // tm,)

    bytes_accessed = int(
        loc_p.size * loc_p.dtype.itemsize
        + loc_t.size * loc_t.dtype.itemsize
        + cls_p.size * cls_p.dtype.itemsize
        + tgt.size * 4 + 16)
    cost = pl.CostEstimate(
        flops=int(T_round * (6 * C + 40)),
        transcendentals=int(T_round * (C + 3)),
        bytes_accessed=bytes_accessed)

    out = pl.pallas_call(
        functools.partial(_focal_loss_kernel, total_rows=T),
        out_shape=jax.ShapeDtypeStruct((4,), jnp.float32),
        grid=grid,
        in_specs=[
            pl.BlockSpec((tm, 4), lambda i: (i, 0)),
            pl.BlockSpec((tm, 4), lambda i: (i, 0)),
            pl.BlockSpec((tm, C), lambda i: (i, 0)),
            pl.BlockSpec((tm, 1), lambda i: (i, 0)),
        ],
        out_specs=pl.BlockSpec(memory_space=pltpu.SMEM),
        compiler_params=pltpu.CompilerParams(
            dimension_semantics=("arbitrary",)),
        cost_estimate=cost,
    )(loc_p, loc_t, cls_p, tgt)
    # out = [loss, loc_loss_sum, cls_loss_sum, num_pos]
    return out[0], out


def focal_loss_reference(loc_preds, loc_targets, cls_preds, cls_targets):
    """Pure-JAX replica of the PyTorch forward for verification."""
    pos = cls_targets > 0
    num_pos = jnp.sum(pos.astype(jnp.float32))
    d = loc_preds - loc_targets
    ad = jnp.abs(d)
    sl1 = jnp.where(ad < 1.0, 0.5 * d * d, ad - 0.5)
    loc_loss = jnp.sum(sl1 * pos[..., None].astype(jnp.float32))

    pos_neg = (cls_targets > -1).astype(jnp.float32)
    p = jax.nn.softmax(cls_preds, axis=-1)
    p = jnp.clip(p, 1e-7, 1.0 - 1e-7)
    C = cls_preds.shape[-1]
    y = jax.nn.one_hot(jnp.maximum(cls_targets, 0), C, dtype=jnp.float32)
    fl = -y * jnp.log(p) * (1.0 - p) ** 2
    cls_loss = jnp.sum(fl * pos_neg[..., None])
    return (loc_loss + cls_loss) / jnp.maximum(num_pos, 1.0)


if __name__ == "__main__":
    # FocalLoss(num_classes) has no learnable parameters -> nothing to init.
    num_classes = 7          # cls_preds has num_classes + 1 = 8 logits
    key = jax.random.PRNGKey(0)

    def make_inputs(B, N, k):
        k1, k2, k3, k4 = jax.random.split(k, 4)
        loc_preds = jax.random.normal(k1, (B, N, 4), dtype=jnp.float32)
        loc_targets = jax.random.normal(k2, (B, N, 4), dtype=jnp.float32)
        cls_preds = jax.random.normal(k3, (B, N, num_classes + 1),
                                      dtype=jnp.float32)
        cls_targets = jax.random.randint(k4, (B, N), -1, num_classes + 1,
                                         dtype=jnp.int32)
        return loc_preds, loc_targets, cls_preds, cls_targets

    # Case 1: small single-tile problem (B=2, N=16 -> T=32).
    a = make_inputs(2, 16, jax.random.fold_in(key, 0))
    loss1, _ = focal_loss_pallas(*a, num_classes)
    loss1 = jax.block_until_ready(loss1)
    ref1 = focal_loss_reference(*a)
    assert jnp.allclose(loss1, ref1, rtol=1e-5, atol=1e-5), (loss1, ref1)

    # Case 2: multi-tile with a ragged tail (T=40, tile_rows=16 -> masked tail).
    b = make_inputs(2, 20, jax.random.fold_in(key, 1))
    loss2, _ = focal_loss_pallas(*b, num_classes, tile_rows=16)
    loss2 = jax.block_until_ready(loss2)
    ref2 = focal_loss_reference(*b)
    assert jnp.allclose(loss2, ref2, rtol=1e-5, atol=1e-5), (loss2, ref2)

    # Case 3: T not a multiple of 8 (T=30 -> tiny 2-row pad with ignore label).
    c = make_inputs(2, 15, jax.random.fold_in(key, 2))
    loss3, _ = focal_loss_pallas(*c, num_classes)
    loss3 = jax.block_until_ready(loss3)
    ref3 = focal_loss_reference(*c)
    assert jnp.allclose(loss3, ref3, rtol=1e-5, atol=1e-5), (loss3, ref3)

    print("KERNEL_OK")
</pallas_src>

<mosaic_0001>
module attributes {stable_mosaic.version = 11 : i64} {
  func.func @_focal_loss_kernel(%arg0: i32, %arg1: memref<32x4xf32, #tpu.memory_space<vmem>>, %arg2: memref<32x4xf32, #tpu.memory_space<vmem>>, %arg3: memref<32x8xf32, #tpu.memory_space<vmem>>, %arg4: memref<32x1xi32, #tpu.memory_space<vmem>>, %arg5: memref<4xf32, #tpu.memory_space<smem>>) attributes {dimension_semantics = [#tpu.dimension_semantics<arbitrary>], iteration_bounds = array<i64: 1>, scalar_prefetch = 0 : i64, scratch_operands = 0 : i64, tpu.core_type = #tpu.core_type<tc>, window_params = [{transform_indices = @transform_0, window_bounds = array<i64: 32, 4>}, {transform_indices = @transform_1, window_bounds = array<i64: 32, 4>}, {transform_indices = @transform_2, window_bounds = array<i64: 32, 8>}, {transform_indices = @transform_3, window_bounds = array<i64: 32, 1>}, {transform_indices = @transform_4, window_bounds = array<i64: 4>}]} {
    %c0_i32 = arith.constant 0 : i32
    %0 = arith.cmpi eq, %arg0, %c0_i32 : i32
    %1 = arith.extui %0 : i1 to i32
    %c0_i32_0 = arith.constant 0 : i32
    %2 = arith.cmpi ne, %1, %c0_i32_0 : i32
    scf.if %2 {
      %cst_34 = arith.constant 0.000000e+00 : f32
      %c1_35 = arith.constant 1 : index
      %94 = memref.load %arg5[%c1_35] : memref<4xf32, #tpu.memory_space<smem>>
      memref.store %cst_34, %arg5[%c1_35] : memref<4xf32, #tpu.memory_space<smem>>
      %cst_36 = arith.constant 0.000000e+00 : f32
      %c2_37 = arith.constant 2 : index
      %95 = memref.load %arg5[%c2_37] : memref<4xf32, #tpu.memory_space<smem>>
      memref.store %cst_36, %arg5[%c2_37] : memref<4xf32, #tpu.memory_space<smem>>
      %cst_38 = arith.constant 0.000000e+00 : f32
      %c3_39 = arith.constant 3 : index
      %96 = memref.load %arg5[%c3_39] : memref<4xf32, #tpu.memory_space<smem>>
      memref.store %cst_38, %arg5[%c3_39] : memref<4xf32, #tpu.memory_space<smem>>
    } else {
    }
    %c0 = arith.constant 0 : index
    %c0_1 = arith.constant 0 : index
    %3 = vector.load %arg4[%c0, %c0_1] : memref<32x1xi32, #tpu.memory_space<vmem>>, vector<32x1xi32>
    %4 = tpu.iota {dimensions = array<i32: 0>} : vector<32x1xi32>
    %c32_i32 = arith.constant 32 : i32
    %5 = arith.muli %arg0, %c32_i32 : i32
    %6 = vector.broadcast %5 : i32 to vector<32x1xi32>
    %7 = arith.addi %4, %6 : vector<32x1xi32>
    %c32_i32_2 = arith.constant 32 : i32
    %8 = vector.broadcast %c32_i32_2 : i32 to vector<32x1xi32>
    %9 = arith.cmpi slt, %7, %8 : vector<32x1xi32>
    %c0_i32_3 = arith.constant 0 : i32
    %10 = vector.broadcast %c0_i32_3 : i32 to vector<32x1xi32>
    %11 = arith.cmpi sgt, %3, %10 : vector<32x1xi32>
    %12 = arith.andi %11, %9 : vector<32x1xi1>
    %c-1_i32 = arith.constant -1 : i32
    %13 = vector.broadcast %c-1_i32 : i32 to vector<32x1xi32>
    %14 = arith.cmpi sgt, %3, %13 : vector<32x1xi32>
    %15 = arith.andi %14, %9 : vector<32x1xi1>
    %c0_4 = arith.constant 0 : index
    %c0_5 = arith.constant 0 : index
    %16 = vector.load %arg1[%c0_4, %c0_5] : memref<32x4xf32, #tpu.memory_space<vmem>>, vector<32x4xf32>
    %c0_6 = arith.constant 0 : index
    %c0_7 = arith.constant 0 : index
    %17 = vector.load %arg2[%c0_6, %c0_7] : memref<32x4xf32, #tpu.memory_space<vmem>>, vector<32x4xf32>
    %18 = arith.subf %16, %17 : vector<32x4xf32>
    %19 = math.absf %18 : vector<32x4xf32>
    %cst = arith.constant 1.000000e+00 : f32
    %20 = vector.broadcast %cst : f32 to vector<32x4xf32>
    %21 = arith.cmpf olt, %19, %20 : vector<32x4xf32>
    %cst_8 = arith.constant 5.000000e-01 : f32
    %22 = vector.broadcast %cst_8 : f32 to vector<32x4xf32>
    %23 = arith.mulf %22, %18 : vector<32x4xf32>
    %24 = arith.mulf %23, %18 : vector<32x4xf32>
    %cst_9 = arith.constant 5.000000e-01 : f32
    %25 = vector.broadcast %cst_9 : f32 to vector<32x4xf32>
    %26 = arith.subf %19, %25 : vector<32x4xf32>
    %27 = arith.select %21, %24, %26 : vector<32x4xi1>, vector<32x4xf32>
    %cst_10 = arith.constant 0.000000e+00 : f32
    %28 = vector.shape_cast %12 : vector<32x1xi1> to vector<32x1xi1>
    %29 = vector.broadcast %28 : vector<32x1xi1> to vector<32x4xi1>
    %30 = vector.broadcast %cst_10 : f32 to vector<32x4xf32>
    %31 = arith.select %29, %27, %30 : vector<32x4xi1>, vector<32x4xf32>
    %32 = vector.shape_cast %31 : vector<32x4xf32> to vector<1x32x4xf32>
    %cst_11 = arith.constant dense<0.000000e+00> : vector<1xf32>
    %33 = vector.multi_reduction <add>, %32, %cst_11 [1, 2] : vector<1x32x4xf32> to vector<1xf32>
    %34 = vector.shape_cast %33 : vector<1xf32> to vector<1x1x1xf32>
    %35 = vector.extract %34[0, 0, 0] : f32 from vector<1x1x1xf32>
    %c0_12 = arith.constant 0 : index
    %c0_13 = arith.constant 0 : index
    %36 = vector.load %arg3[%c0_12, %c0_13] : memref<32x8xf32, #tpu.memory_space<vmem>>, vector<32x8xf32>
    %cst_14 = arith.constant dense<0xFF800000> : vector<32xf32>
    %37 = vector.multi_reduction <maximumf>, %36, %cst_14 [1] : vector<32x8xf32> to vector<32xf32>
    %38 = vector.shape_cast %37 : vector<32xf32> to vector<32x1xf32>
    %39 = vector.broadcast %38 : vector<32x1xf32> to vector<32x8xf32>
    %40 = arith.subf %36, %39 : vector<32x8xf32>
    %41 = math.exp %40 : vector<32x8xf32>
    %cst_15 = arith.constant dense<0.000000e+00> : vector<32xf32>
    %42 = vector.multi_reduction <add>, %41, %cst_15 [1] : vector<32x8xf32> to vector<32xf32>
    %43 = vector.shape_cast %42 : vector<32xf32> to vector<32x1xf32>
    %44 = math.log %43 : vector<32x1xf32>
    %45 = arith.addf %38, %44 : vector<32x1xf32>
    %46 = tpu.iota {dimensions = array<i32: 1>} : vector<32x8xi32>
    %47 = vector.broadcast %3 : vector<32x1xi32> to vector<32x8xi32>
    %48 = arith.cmpi eq, %46, %47 : vector<32x8xi32>
    %cst_16 = arith.constant 0.000000e+00 : f32
    %49 = vector.broadcast %cst_16 : f32 to vector<32x8xf32>
    %50 = arith.select %48, %36, %49 : vector<32x8xi1>, vector<32x8xf32>
    %cst_17 = arith.constant dense<0.000000e+00> : vector<32xf32>
    %51 = vector.multi_reduction <add>, %50, %cst_17 [1] : vector<32x8xf32> to vector<32xf32>
    %52 = vector.shape_cast %51 : vector<32xf32> to vector<32x1xf32>
    %53 = arith.subf %52, %45 : vector<32x1xf32>
    %54 = math.exp %53 : vector<32x1xf32>
    %cst_18 = arith.constant 1.000000e-07 : f32
    %cst_19 = arith.constant 0.99999988 : f32
    %55 = vector.broadcast %cst_18 : f32 to vector<32x1xf32>
    %56 = arith.maximumf %55, %54 : vector<32x1xf32>
    %57 = vector.broadcast %cst_19 : f32 to vector<32x1xf32>
    %58 = arith.minimumf %57, %56 : vector<32x1xf32>
    %cst_20 = arith.constant -16.1180954 : f32
    %cst_21 = arith.constant -1.00000008E-7 : f32
    %59 = vector.broadcast %cst_20 : f32 to vector<32x1xf32>
    %60 = arith.maximumf %59, %53 : vector<32x1xf32>
    %61 = vector.broadcast %cst_21 : f32 to vector<32x1xf32>
    %62 = arith.minimumf %61, %60 : vector<32x1xf32>
    %cst_22 = arith.constant 1.000000e+00 : f32
    %63 = vector.broadcast %cst_22 : f32 to vector<32x1xf32>
    %64 = arith.subf %63, %58 : vector<32x1xf32>
    %65 = arith.mulf %64, %64 : vector<32x1xf32>
    %cst_23 = arith.constant 0.000000e+00 : f32
    %66 = vector.broadcast %cst_23 : f32 to vector<32x1xf32>
    %67 = arith.subf %66, %65 : vector<32x1xf32>
    %68 = arith.mulf %67, %62 : vector<32x1xf32>
    %cst_24 = arith.constant 0.000000e+00 : f32
    %69 = vector.broadcast %cst_24 : f32 to vector<32x1xf32>
    %70 = arith.select %15, %68, %69 : vector<32x1xi1>, vector<32x1xf32>
    %71 = vector.shape_cast %70 : vector<32x1xf32> to vector<1x32x1xf32>
    %cst_25 = arith.constant dense<0.000000e+00> : vector<1xf32>
    %72 = vector.multi_reduction <add>, %71, %cst_25 [1, 2] : vector<1x32x1xf32> to vector<1xf32>
    %73 = vector.shape_cast %72 : vector<1xf32> to vector<1x1x1xf32>
    %74 = vector.extract %73[0, 0, 0] : f32 from vector<1x1x1xf32>
    %cst_26 = arith.constant 1.000000e+00 : f32
    %cst_27 = arith.constant 0.000000e+00 : f32
    %75 = vector.broadcast %cst_26 : f32 to vector<32x1xf32>
    %76 = vector.broadcast %cst_27 : f32 to vector<32x1xf32>
    %77 = arith.select %12, %75, %76 : vector<32x1xi1>, vector<32x1xf32>
    %78 = vector.shape_cast %77 : vector<32x1xf32> to vector<1x32x1xf32>
    %cst_28 = arith.constant dense<0.000000e+00> : vector<1xf32>
    %79 = vector.multi_reduction <add>, %78, %cst_28 [1, 2] : vector<1x32x1xf32> to vector<1xf32>
    %80 = vector.shape_cast %79 : vector<1xf32> to vector<1x1x1xf32>
    %81 = vector.extract %80[0, 0, 0] : f32 from vector<1x1x1xf32>
    %c1 = arith.constant 1 : index
    %82 = memref.load %arg5[%c1] : memref<4xf32, #tpu.memory_space<smem>>
    %83 = arith.addf %82, %35 : f32
    %c1_29 = arith.constant 1 : index
    %84 = memref.load %arg5[%c1_29] : memref<4xf32, #tpu.memory_space<smem>>
    memref.store %83, %arg5[%c1_29] : memref<4xf32, #tpu.memory_space<smem>>
    %c2 = arith.constant 2 : index
    %85 = memref.load %arg5[%c2] : memref<4xf32, #tpu.memory_space<smem>>
    %86 = arith.addf %85, %74 : f32
    %c2_30 = arith.constant 2 : index
    %87 = memref.load %arg5[%c2_30] : memref<4xf32, #tpu.memory_space<smem>>
    memref.store %86, %arg5[%c2_30] : memref<4xf32, #tpu.memory_space<smem>>
    %c3 = arith.constant 3 : index
    %88 = memref.load %arg5[%c3] : memref<4xf32, #tpu.memory_space<smem>>
    %89 = arith.addf %88, %81 : f32
    %c3_31 = arith.constant 3 : index
    %90 = memref.load %arg5[%c3_31] : memref<4xf32, #tpu.memory_space<smem>>
    memref.store %89, %arg5[%c3_31] : memref<4xf32, #tpu.memory_space<smem>>
    %c0_i32_32 = arith.constant 0 : i32
    %91 = arith.cmpi eq, %arg0, %c0_i32_32 : i32
    %92 = arith.extui %91 : i1 to i32
    %c0_i32_33 = arith.constant 0 : i32
    %93 = arith.cmpi ne, %92, %c0_i32_33 : i32
    scf.if %93 {
      %c3_34 = arith.constant 3 : index
      %94 = memref.load %arg5[%c3_34] : memref<4xf32, #tpu.memory_space<smem>>
      %cst_35 = arith.constant 1.000000e+00 : f32
      %95 = arith.maximumf %94, %cst_35 : f32
      %c1_36 = arith.constant 1 : index
      %96 = memref.load %arg5[%c1_36] : memref<4xf32, #tpu.memory_space<smem>>
      %c2_37 = arith.constant 2 : index
      %97 = memref.load %arg5[%c2_37] : memref<4xf32, #tpu.memory_space<smem>>
      %98 = arith.addf %96, %97 : f32
      %99 = arith.divf %98, %95 : f32
      %c0_38 = arith.constant 0 : index
      %100 = memref.load %arg5[%c0_38] : memref<4xf32, #tpu.memory_space<smem>>
      memref.store %99, %arg5[%c0_38] : memref<4xf32, #tpu.memory_space<smem>>
    } else {
    }
    return
  }
  func.func @transform_0(%arg0: i32) -> (i32, i32) {
    %c0_i32 = arith.constant 0 : i32
    %c0_i32_0 = arith.constant 0 : i32
    return %arg0, %c0_i32 : i32, i32
  }
  func.func @transform_1(%arg0: i32) -> (i32, i32) {
    %c0_i32 = arith.constant 0 : i32
    %c0_i32_0 = arith.constant 0 : i32
    return %arg0, %c0_i32 : i32, i32
  }
  func.func @transform_2(%arg0: i32) -> (i32, i32) {
    %c0_i32 = arith.constant 0 : i32
    %c0_i32_0 = arith.constant 0 : i32
    return %arg0, %c0_i32 : i32, i32
  }
  func.func @transform_3(%arg0: i32) -> (i32, i32) {
    %c0_i32 = arith.constant 0 : i32
    %c0_i32_0 = arith.constant 0 : i32
    return %arg0, %c0_i32 : i32, i32
  }
  func.func @transform_4(%arg0: i32) -> i32 {
    %c0_i32 = arith.constant 0 : i32
    %c0_i32_0 = arith.constant 0 : i32
    return %c0_i32 : i32
  }
}

</mosaic_0001>

<llo_original>
// kernel: focal_loss_pallas.1
$region0: #{focal_loss_pallas.1}
  #allocation0 [shape = 'u32[]', space=smem, size = 0x4, offset = 0x4, fixed_abs, tag = 'smem constant byte address 0x4 - core index']
  #allocation1 [shape = 'u32[144,128]{1,0:T(1,128)}', space=vmem, size = 0x12000, scoped, tag = 'internal scratch']
  %s0 = inlined_call_operand.vmem [shape: f32[32,4], index: 0, kind: input, shape index: {}]
  %s1 = inlined_call_operand.vmem [shape: f32[32,4], index: 1, kind: input, shape index: {}]
  %s2 = inlined_call_operand.vmem [shape: f32[32,8], index: 2, kind: input, shape index: {}]
  %s3 = inlined_call_operand.vmem [shape: s32[32,1], index: 3, kind: input, shape index: {}]
  %s4 = inlined_call_operand.vmem [shape: f32[4], index: 4, kind: output, shape index: {}]
  %s5 = sld [smem:[#allocation0]]
  $region34: #{focal_loss_pallas.1} parent=0
    _
  %s7 = ssub.s32 1, %s5
  %s8 = scalar_select 0, %s7, %s5
  $region1: #{focal_loss_pallas.1} parent=0
    #allocation2 [shape = 'u8[512]{0}', space=smem, size = 0x200, scoped, tag = 'output window, operand 0, single buffered']
    #allocation3 [shape = 's32[1]{0}', space=sflag, size = 0x4, scoped, tag = 'scoped memory for focal_loss_pallas.1']
    %9 = vsyncpa [#allocation3], 0
    // Predicated region
    $region2: #{focal_loss_pallas.1} parent=1 // pred_check
      _
    $region3: #{focal_loss_pallas.1} parent=1 // pred_check_branch
      %11 = sbr.rel (0) target = $region5
    $region4: #{focal_loss_pallas.1} parent=1 // pred_region
      _
    $region5: #{focal_loss_pallas.1} parent=1 // pred_fallthru
      _
    // Predicated region
    $region6: #{focal_loss_pallas.1} parent=1 // pred_check
      _
    $region7: #{focal_loss_pallas.1} parent=1 // pred_check_branch
      %13 = sbr.rel (0) target = $region9
    $region8: #{focal_loss_pallas.1} parent=1 // pred_region
      _
    $region9: #{focal_loss_pallas.1} parent=1 // pred_fallthru
      _
    // Predicated region
    $region10: #{focal_loss_pallas.1} parent=1 // pred_check
      _
    $region11: #{focal_loss_pallas.1} parent=1 // pred_check_branch
      %15 = sbr.rel (0) target = $region13
    $region12: #{focal_loss_pallas.1} parent=1 // pred_region
      _
    $region13: #{focal_loss_pallas.1} parent=1 // pred_fallthru
      _
    // Predicated region
    $region14: #{focal_loss_pallas.1} parent=1 // pred_check
      _
    $region15: #{focal_loss_pallas.1} parent=1 // pred_check_branch
      %17 = sbr.rel (0) target = $region17
    $region16: #{focal_loss_pallas.1} parent=1 // pred_region
      _
    $region17: #{focal_loss_pallas.1} parent=1 // pred_fallthru
      _
    %p18 = scmp.eq.s32.totalorder 0, 0
    // Predicated region
    $region18: #{focal_loss_pallas.1} parent=1 // pred_check
      %p19 = pneg %p18
    $region19: #{focal_loss_pallas.1} parent=1 // pred_check_branch
      %21 = sbr.rel (%p19) target = $region21
    $region20: #{focal_loss_pallas.1} parent=1 // pred_region
      %s22 = scalar_lea.smem [#allocation2], 1
      %23 = sst [smem:[%s22]] 0.0
      %s24 = scalar_lea.smem [#allocation2], 2
      %25 = sst [smem:[%s24]] 0.0
      %s26 = scalar_lea.smem [#allocation2], 3
      %27 = sst [smem:[%s26]] 0.0
    $region21: #{focal_loss_pallas.1} parent=1 // pred_fallthru
      _
    %v28 = vld [vmem:[%s3] sm:$0xff]
    %v29 = vld [vmem:[%s3 + $0x8] sm:$0xff]
    %v30 = vld [vmem:[%s3 + $0x10] sm:$0xff]
    %v31 = vld [vmem:[%s3 + $0x18] sm:$0xff]
    %v32 = vlaneseq
    %v33 = vshrl.u32 %v32, 7
    %v34 = vadd.s32 %v33, 8
    %v35 = vadd.s32 %v33, 16
    %v36 = vadd.s32 %v33, 24
    %s37 = smul.u32 0, 32
    %v38 = vstv %s37
    %v39 = vadd.s32 %v33, %v38
    %v40 = vadd.s32 %v34, %v38
    %v41 = vadd.s32 %v35, %v38
    %v42 = vadd.s32 %v36, %v38
    %vm43 = vcmp.lt.s32.totalorder %v39, 32
    %vm44 = vcmp.lt.s32.totalorder %v40, 32
    %vm45 = vcmp.lt.s32.totalorder %v41, 32
    %vm46 = vcmp.lt.s32.totalorder %v42, 32
    %vm47 = vcmp.gt.s32.totalorder %v28, 0
    %vm48 = vcmp.gt.s32.totalorder %v29, 0
    %vm49 = vcmp.gt.s32.totalorder %v30, 0
    %vm50 = vcmp.gt.s32.totalorder %v31, 0
    %vm51 = vmand %vm47, %vm43
    %vm52 = vmand %vm48, %vm44
    %vm53 = vmand %vm49, %vm45
    %vm54 = vmand %vm50, %vm46
    %vm55 = vcmp.gt.s32.totalorder %v28, 4294967295
    %vm56 = vcmp.gt.s32.totalorder %v29, 4294967295
    %vm57 = vcmp.gt.s32.totalorder %v30, 4294967295
    %vm58 = vcmp.gt.s32.totalorder %v31, 4294967295
    %vm59 = vmand %vm55, %vm43
    %vm60 = vmand %vm56, %vm44
    %vm61 = vmand %vm57, %vm45
    %vm62 = vmand %vm58, %vm46
    %v63 = vld [vmem:[%s0] sm:$0xff]
    %v64 = vld [vmem:[%s0 + $0x8] sm:$0xff]
    %v65 = vld [vmem:[%s0 + $0x10] sm:$0xff]
    %v66 = vld [vmem:[%s0 + $0x18] sm:$0xff]
    %v67 = vld [vmem:[%s1] sm:$0xff]
    %v68 = vld [vmem:[%s1 + $0x8] sm:$0xff]
    %v69 = vld [vmem:[%s1 + $0x10] sm:$0xff]
    %v70 = vld [vmem:[%s1 + $0x18] sm:$0xff]
    %v71 = vsub.f32 %v63, %v67
    %v72 = vsub.f32 %v64, %v68
    %v73 = vsub.f32 %v65, %v69
    %v74 = vsub.f32 %v66, %v70
    %v75 = vand.u32 2147483647, %v71
    %v76 = vand.u32 2147483647, %v72
    %v77 = vand.u32 2147483647, %v73
    %v78 = vand.u32 2147483647, %v74
    %vm79 = vcmp.lt.f32.partialorder %v75, 1.0
    %vm80 = vcmp.lt.f32.partialorder %v76, 1.0
    %vm81 = vcmp.lt.f32.partialorder %v77, 1.0
    %vm82 = vcmp.lt.f32.partialorder %v78, 1.0
    %v83 = vmul.f32 %v71, 0.5
    %v84 = vmul.f32 %v72, 0.5
    %v85 = vmul.f32 %v73, 0.5
    %v86 = vmul.f32 %v74, 0.5
    %v87 = vmul.f32 %v83, %v71
    %v88 = vmul.f32 %v84, %v72
    %v89 = vmul.f32 %v85, %v73
    %v90 = vmul.f32 %v86, %v74
    %v91 = vsub.f32 %v75, 0.5
    %v92 = vsub.f32 %v76, 0.5
    %v93 = vsub.f32 %v77, 0.5
    %v94 = vsub.f32 %v78, 0.5
    %v95 = vsel %vm79, %v87, %v91
    %v96 = vsel %vm80, %v88, %v92
    %v97 = vsel %vm81, %v89, %v93
    %v98 = vsel %vm82, %v90, %v94
    %v99 = vsel %vm51, 1, 0
    %v100 = vsel %vm52, 1, 0
    %v101 = vsel %vm53, 1, 0
    %v102 = vsel %vm54, 1, 0
    %103 = vset.pattern.permute.xlu0 0
    %104 = vperm.xlu0 %103, %v99
    %v105 = vpop.permute.xlu0 %104
    %106 = vset.pattern.permute.xlu0 0
    %107 = vperm.xlu0 %106, %v100
    %v108 = vpop.permute.xlu0 %107
    %109 = vset.pattern.permute.xlu0 0
    %110 = vperm.xlu0 %109, %v101
    %v111 = vpop.permute.xlu0 %110
    %112 = vset.pattern.permute.xlu0 0
    %113 = vperm.xlu0 %112, %v102
    %v114 = vpop.permute.xlu0 %113
    %vm115 = vcmp.eq.s32.totalorder %v105, 1
    %vm116 = vcmp.eq.s32.totalorder %v108, 1
    %vm117 = vcmp.eq.s32.totalorder %v111, 1
    %vm118 = vcmp.eq.s32.totalorder %v114, 1
    %v119 = vsel %vm115, %v95, 0.0
    %v120 = vsel %vm116, %v96, 0.0
    %v121 = vsel %vm117, %v97, 0.0
    %v122 = vsel %vm118, %v98, 0.0
    %vm123 = vcmask 31744
    %v124 = vsel %vm123, %v119, 0.0
    %v125 = vsel %vm123, %v120, 0.0
    %v126 = vadd.f32 %v124, %v125
    %v127 = vsel %vm123, %v121, 0.0
    %v128 = vadd.f32 %v126, %v127
    %v129 = vsel %vm123, %v122, 0.0
    %v130 = vadd.f32 %v128, %v129
    %131 = vadd.xlane.f32.xlu0 %v130
    %v132 = vpop.xlane.xlu0 %131
    %v133 = vrot.slane %v132, 4
    %v134 = vadd.f32 %v132, %v133
    %v135 = vrot.slane %v134, 2
    %v136 = vadd.f32 %v134, %v135
    %v137 = vrot.slane %v136, 1
    %v138 = vadd.f32 %v136, %v137
    %s139 = vtos %v138
    %v140 = vld [vmem:[%s2] sm:$0xff]
    %v141 = vld [vmem:[%s2 + $0x8] sm:$0xff]
    %v142 = vld [vmem:[%s2 + $0x10] sm:$0xff]
    %v143 = vld [vmem:[%s2 + $0x18] sm:$0xff]
    %vm144 = vcmask 64512
    %v145 = vsel %vm144, %v140, -inf
    %146 = vmax.xlane.f32.xlu0 %v145
    %v147 = vpop.xlane.xlu0 %146
    %v148 = vsel %vm144, %v141, -inf
    %149 = vmax.xlane.f32.xlu0 %v148
    %v150 = vpop.xlane.xlu0 %149
    %v151 = vsel %vm144, %v142, -inf
    %152 = vmax.xlane.f32.xlu0 %v151
    %v153 = vpop.xlane.xlu0 %152
    %v154 = vsel %vm144, %v143, -inf
    %155 = vmax.xlane.f32.xlu0 %v154
    %v156 = vpop.xlane.xlu0 %155
    %v157 = vsub.f32 %v140, %v147
    %v158 = vsub.f32 %v141, %v150
    %v159 = vsub.f32 %v142, %v153
    %v160 = vsub.f32 %v143, %v156
    %v161 = vmul.f32 %v157, 1.442695
    %v162 = vpow.pop %v161
    %v163 = vmul.f32 %v158, 1.442695
    %v164 = vpow.pop %v163
    %v165 = vmul.f32 %v159, 1.442695
    %v166 = vpow.pop %v165
    %v167 = vmul.f32 %v160, 1.442695
    %v168 = vpow.pop %v167
    %v169 = vsel %vm144, %v162, 0.0
    %170 = vadd.xlane.f32.xlu0 %v169
    %v171 = vpop.xlane.xlu0 %170
    %v172 = vsel %vm144, %v164, 0.0
    %173 = vadd.xlane.f32.xlu0 %v172
    %v174 = vpop.xlane.xlu0 %173
    %v175 = vsel %vm144, %v166, 0.0
    %176 = vadd.xlane.f32.xlu0 %v175
    %v177 = vpop.xlane.xlu0 %176
    %v178 = vsel %vm144, %v168, 0.0
    %179 = vadd.xlane.f32.xlu0 %v178
    %v180 = vpop.xlane.xlu0 %179
    %v181 = vlog2.pop %v171
    %v182 = vmul.f32 %v181, 0.6931472
    %v183 = vlog2.pop %v174
    %v184 = vmul.f32 %v183, 0.6931472
    %v185 = vlog2.pop %v177
    %v186 = vmul.f32 %v185, 0.6931472
    %v187 = vlog2.pop %v180
    %v188 = vmul.f32 %v187, 0.6931472
    %v189 = vadd.f32 %v147, %v182
    %v190 = vadd.f32 %v150, %v184
    %v191 = vadd.f32 %v153, %v186
    %v192 = vadd.f32 %v156, %v188
    %v193 = vlaneseq
    %v194 = vand.u32 %v193, 127
    %195 = vset.pattern.permute.xlu0 0
    %196 = vperm.xlu0 %195, %v28
    %v197 = vpop.permute.xlu0 %196
    %198 = vset.pattern.permute.xlu0 0
    %199 = vperm.xlu0 %198, %v29
    %v200 = vpop.permute.xlu0 %199
    %201 = vset.pattern.permute.xlu0 0
    %202 = vperm.xlu0 %201, %v30
    %v203 = vpop.permute.xlu0 %202
    %204 = vset.pattern.permute.xlu0 0
    %205 = vperm.xlu0 %204, %v31
    %v206 = vpop.permute.xlu0 %205
    %vm207 = vcmp.eq.s32.totalorder %v194, %v197
    %vm208 = vcmp.eq.s32.totalorder %v194, %v200
    %vm209 = vcmp.eq.s32.totalorder %v194, %v203
    %vm210 = vcmp.eq.s32.totalorder %v194, %v206
    %v211 = vsel %vm207, %v140, 0.0
    %v212 = vsel %vm208, %v141, 0.0
    %v213 = vsel %vm209, %v142, 0.0
    %v214 = vsel %vm210, %v143, 0.0
    %v215 = vsel %vm144, %v211, 0.0
    %216 = vadd.xlane.f32.xlu0 %v215
    %v217 = vpop.xlane.xlu0 %216
    %v218 = vsel %vm144, %v212, 0.0
    %219 = vadd.xlane.f32.xlu0 %v218
    %v220 = vpop.xlane.xlu0 %219
    %v221 = vsel %vm144, %v213, 0.0
    %222 = vadd.xlane.f32.xlu0 %v221
    %v223 = vpop.xlane.xlu0 %222
    %v224 = vsel %vm144, %v214, 0.0
    %225 = vadd.xlane.f32.xlu0 %v224
    %v226 = vpop.xlane.xlu0 %225
    %v227 = vsub.f32 %v217, %v189
    %v228 = vsub.f32 %v220, %v190
    %v229 = vsub.f32 %v223, %v191
    %v230 = vsub.f32 %v226, %v192
    %v231 = vmul.f32 %v227, 1.442695
    %v232 = vpow.pop %v231
    %v233 = vmul.f32 %v228, 1.442695
    %v234 = vpow.pop %v233
    %v235 = vmul.f32 %v229, 1.442695
    %v236 = vpow.pop %v235
    %v237 = vmul.f32 %v230, 1.442695
    %v238 = vpow.pop %v237
    %v239 = vmax.f32 %v232, 1e-07
    %v240 = vmax.f32 %v234, 1e-07
    %v241 = vmax.f32 %v236, 1e-07
    %v242 = vmax.f32 %v238, 1e-07
    %v243 = vmin.f32 %v239, 0.9999999
    %v244 = vmin.f32 %v240, 0.9999999
    %v245 = vmin.f32 %v241, 0.9999999
    %v246 = vmin.f32 %v242, 0.9999999
    %v247 = vmax.f32 %v227, -16.118095
    %v248 = vmax.f32 %v228, -16.118095
    %v249 = vmax.f32 %v229, -16.118095
    %v250 = vmax.f32 %v230, -16.118095
    %v251 = vmin.f32 %v247, -1.0000001e-07
    %v252 = vmin.f32 %v248, -1.0000001e-07
    %v253 = vmin.f32 %v249, -1.0000001e-07
    %v254 = vmin.f32 %v250, -1.0000001e-07
    %v255 = vsub.f32 1.0, %v243
    %v256 = vsub.f32 1.0, %v244
    %v257 = vsub.f32 1.0, %v245
    %v258 = vsub.f32 1.0, %v246
    %v259 = vmul.f32 %v255, %v255
    %v260 = vmul.f32 %v256, %v256
    %v261 = vmul.f32 %v257, %v257
    %v262 = vmul.f32 %v258, %v258
    %v263 = vsub.f32 0.0, %v259
    %v264 = vsub.f32 0.0, %v260
    %v265 = vsub.f32 0.0, %v261
    %v266 = vsub.f32 0.0, %v262
    %v267 = vmul.f32 %v263, %v251
    %v268 = vmul.f32 %v264, %v252
    %v269 = vmul.f32 %v265, %v253
    %v270 = vmul.f32 %v266, %v254
    %v271 = vsel %vm59, %v267, 0.0
    %v272 = vsel %vm60, %v268, 0.0
    %v273 = vsel %vm61, %v269, 0.0
    %v274 = vsel %vm62, %v270, 0.0
    %vm275 = vcmask 7168
    %v276 = vsel %vm275, %v271, 0.0
    %v277 = vsel %vm275, %v272, 0.0
    %v278 = vadd.f32 %v276, %v277
    %v279 = vsel %vm275, %v273, 0.0
    %v280 = vadd.f32 %v278, %v279
    %v281 = vsel %vm275, %v274, 0.0
    %v282 = vadd.f32 %v280, %v281
    %283 = vadd.xlane.f32.xlu0 %v282
    %v284 = vpop.xlane.xlu0 %283
    %v285 = vrot.slane %v284, 4
    %v286 = vadd.f32 %v284, %v285
    %v287 = vrot.slane %v286, 2
    %v288 = vadd.f32 %v286, %v287
    %v289 = vrot.slane %v288, 1
    %v290 = vadd.f32 %v288, %v289
    %s291 = vtos %v290
    %v292 = vsel %vm51, 1.0, 0.0
    %v293 = vsel %vm52, 1.0, 0.0
    %v294 = vsel %vm53, 1.0, 0.0
    %v295 = vsel %vm54, 1.0, 0.0
    %v296 = vsel %vm275, %v292, 0.0
    %v297 = vsel %vm275, %v293, 0.0
    %v298 = vadd.f32 %v296, %v297
    %v299 = vsel %vm275, %v294, 0.0
    %v300 = vadd.f32 %v298, %v299
    %v301 = vsel %vm275, %v295, 0.0
    %v302 = vadd.f32 %v300, %v301
    %303 = vadd.xlane.f32.xlu0 %v302
    %v304 = vpop.xlane.xlu0 %303
    %v305 = vrot.slane %v304, 4
    %v306 = vadd.f32 %v304, %v305
    %v307 = vrot.slane %v306, 2
    %v308 = vadd.f32 %v306, %v307
    %v309 = vrot.slane %v308, 1
    %v310 = vadd.f32 %v308, %v309
    %s311 = vtos %v310
    %s312 = sld [smem:[#allocation2 + $0x1]]
    %s313 = sadd.f32 %s312, %s139
    %s314 = scalar_lea.smem [#allocation2], 1
    %315 = sst [smem:[%s314]] %s313
    %s316 = sld [smem:[#allocation2 + $0x2]]
    %s317 = sadd.f32 %s316, %s291
    %s318 = scalar_lea.smem [#allocation2], 2
    %319 = sst [smem:[%s318]] %s317
    %s320 = sld [smem:[#allocation2 + $0x3]]
    %s321 = sadd.f32 %s320, %s311
    %s322 = scalar_lea.smem [#allocation2], 3
    %323 = sst [smem:[%s322]] %s321
    // Predicated region
    $region22: #{focal_loss_pallas.1} parent=1 // pred_check
      %p324 = pneg %p18
    $region23: #{focal_loss_pallas.1} parent=1 // pred_check_branch
      %326 = sbr.rel (%p324) target = $region25
    $region24: #{focal_loss_pallas.1} parent=1 // pred_region
      %s327 = sld [smem:[#allocation2 + $0x3]]
      %s328 = smax.f32 %s327, 1.0
      %s329 = sld [smem:[#allocation2 + $0x1]]
      %s330 = sld [smem:[#allocation2 + $0x2]]
      %s331 = sadd.f32 %s329, %s330
      %v332 = vstv %s328
      %v333 = vrcp.pop %v332
      %s334 = vtos %v333
      %s335 = smul.f32 %s331, %s334
      %s336 = scalar_lea.smem [#allocation2], 0
      %337 = sst [smem:[%s336]] %s335
    $region25: #{focal_loss_pallas.1} parent=1 // pred_fallthru
      _
    // Predicated region
    $region26: #{focal_loss_pallas.1} parent=1 // pred_check
      _
    $region27: #{focal_loss_pallas.1} parent=1 // pred_check_branch
      %339 = sbr.rel (0) target = $region29
    $region28: #{focal_loss_pallas.1} parent=1 // pred_region
      %s341 = ssub.s32 16, 16
      %342 = vsyncadd [#allocation3], %s341
      %s344 = sshll.u32 %s4, 4
      %s345 = int_to_ptr.vmem [resolvable:$true] %s344
      %347 = dma.smem_to_vmem [#allocation2], 16, %s345, [#allocation3]
    $region29: #{focal_loss_pallas.1} parent=1 // pred_fallthru
      _
    // Predicated region
    $region30: #{focal_loss_pallas.1} parent=1 // pred_check
      _
    $region31: #{focal_loss_pallas.1} parent=1 // pred_check_branch
      %349 = sbr.rel (0) target = $region33
    $region32: #{focal_loss_pallas.1} parent=1 // pred_region
      %350 = dma.done [#allocation3], 16
    $region33: #{focal_loss_pallas.1} parent=1 // pred_fallthru
      _
    %351 = sfence
    %352 = vsyncpa [#allocation3], 1

</llo_original>
